<compile_context>
chip_gen: v7x
topology: tpu7x:2x2x1
jax: 0.10.0
libtpu: 0.0.40
codegen_flags: <defaults>
</compile_context>

<pallas_src>
import functools
import numpy as np

import jax
import jax.numpy as jnp
from jax import lax
from jax.experimental import pallas as pl
from jax.experimental.pallas import tpu as pltpu


def _adaptive_pool_matrix_1d(n_in_dim: int, n_out_dim: int) -> np.ndarray:
    """P[i, o] = 1/len(bin_o) if input index i lies in adaptive-avg-pool bin o."""
    P = np.zeros((n_in_dim, n_out_dim), dtype=np.float32)
    for o in range(n_out_dim):
        s = (o * n_in_dim) // n_out_dim
        e = ((o + 1) * n_in_dim + n_out_dim - 1) // n_out_dim  # ceil
        P[s:e, o] = 1.0 / float(e - s)
    return P


def _pick_groups_per_block(G, N, S, itemsize, max_bytes=4 * 1024 * 1024):
    """Pick Gb (groups per grid step), a divisor of G.

    Purely byte-driven (no matmul-row cap): the kernel is HBM-read-bound, so
    the only constraints are the per-step x block <= max_bytes and enough grid
    steps for pipelining / megacore.  Preference order:
      1) even grid with >= 4 steps (both v7x TensorCores get >= 2 steps),
      2) >= 2 steps (DMA/compute overlap),
      3) anything (grid = 1),
    taking the LARGEST feasible block within each tier.
    """
    per_group = N * S * itemsize
    divisors = [d for d in range(1, G + 1) if G % d == 0]
    fits = [d for d in divisors if d * per_group <= max_bytes]
    if not fits:
        return 1  # one group per step even if it exceeds the soft budget
    for pred in (lambda d: (G // d) >= 4 and (G // d) % 2 == 0,
                 lambda d: (G // d) >= 2,
                 lambda d: True):
        cand = [d for d in fits if pred(d)]
        if cand:
            return max(cand)
    return 1


def _sar_kernel(x_ref, w_ref, b_ref, pool_ref, o_ref, *, w_out, precision):
    # x_ref   : (Gb, N, S)    Gb (batch,channel) groups, S = w_in*w_in (lanes)
    # w_ref   : (Gb, N, 1)    grouped-1x1-conv weights (per-group rows)
    # b_ref   : (Gb, 1, 1)    conv bias (per-group rows)
    # pool_ref: (S, K+1)      adaptive-avg-pool matrix + fused mean column
    # o_ref   : (Gb, N, K)
    Gb, N, S = x_ref.shape
    x = x_ref[...]                                                    # (Gb, N, S)

    # grouped 1x1 conv on the VPU: mask[g, s] = sum_n w[g, n] * x[g, n, s] + b[g]
    mask = jnp.sum(w_ref[...] * x, axis=1, keepdims=True) + b_ref[...]  # (Gb, 1, S)
    mask_x = mask * x                                                 # (Gb, N, S)

    if w_out == 1:
        # adaptive pool to 1x1 == spatial mean: lane reduce on the XLU, no MXU.
        pooled = jnp.mean(mask_x, axis=2, keepdims=True)              # (Gb, N, 1)
        # squash along the capsule axis; rsqrt goes to the EUP slot.
        xq = jnp.sum(pooled * pooled, axis=1, keepdims=True)          # (Gb, 1, 1)
        out = (xq / (1.0 + xq)) * pooled * lax.rsqrt(xq + 1e-7)
    else:
        K = w_out * w_out
        # One batched MXU matmul: (Gb*N, S) @ (S, K+1).  With N a multiple of
        # the sublane packing these reshapes only split/merge whole sublane
        # tiles (layout-free).  Column K of pool_ref is (1/K)*rowsum(P), so the
        # spatial mean m2 comes out of the same matmul for free.
        res = jnp.dot(
            mask_x.reshape(Gb * N, S), pool_ref[...],
            preferred_element_type=jnp.float32,
            precision=precision,
        )                                                             # (Gb*N, K+1)
        pooled = res[:, :K].reshape(Gb, N, K)                         # (Gb, N, K)
        m2 = res[:, K:K + 1].reshape(Gb, N, 1)                        # (Gb, N, 1)
        # squash_scalar along the capsule axis (tiny (Gb,1,1) operand; keep the
        # eps-free sqrt/divide to match PyTorch semantics exactly).
        xq = jnp.sum(m2 * m2, axis=1, keepdims=True)                  # (Gb, 1, 1)
        out = (jnp.sqrt(xq) / (1.0 + xq)) * pooled                    # (Gb, N, K)

    o_ref[...] = out.astype(o_ref.dtype)


def self_attention_routing(x, weight, bias, w_out,
                           precision=jax.lax.Precision.HIGHEST):
    """x: (B, ch_in, n_in, w_in, w_in) f32; weight: (ch_in, n_in); bias: (ch_in,)."""
    B, C, N, H, W = x.shape
    assert H == W, "module assumes square spatial input (w_in x w_in)"
    S = H * W
    K = w_out * w_out
    G = B * C
    itemsize = np.dtype(x.dtype).itemsize

    # The in-kernel (Gb, N, S) <-> (Gb*N, S) merge is layout-free only when N
    # is a multiple of the sublane packing for this dtype.
    sublane_pack = {4: 8, 2: 16, 1: 32}.get(itemsize, 8)
    assert N % sublane_pack == 0, (
        f"n_in={N} must be a multiple of {sublane_pack} for dtype {x.dtype} "
        "(layout-free capsule-axis reshape inside the kernel)")

    Gb = _pick_groups_per_block(G, N, S, itemsize)
    grid = G // Gb

    # 2D adaptive-avg-pool as an (S, K) matrix (kron of two 1D pooling
    # matrices), plus one fused column (1/K)*rowsum(P) that yields the spatial
    # mean m2 directly from the same matmul.
    P1 = _adaptive_pool_matrix_1d(H, w_out)
    P2d = np.kron(P1, P1)                                            # (S, K)
    mean_col = P2d.sum(axis=1, keepdims=True) / float(K)             # (S, 1)
    pool_mat = jnp.asarray(
        np.concatenate([P2d, mean_col], axis=1), dtype=jnp.float32)  # (S, K+1)

    x3 = x.reshape(G, N, S)

    # Per-group params, tiled with the SAME index_map as x (no m | B
    # residency constraint).  Group g = b*C + c uses channel c = g % C.
    w_full = jnp.tile(weight.astype(jnp.float32), (B, 1)).reshape(G, N, 1)
    b_full = jnp.tile(bias.astype(jnp.float32), (B,)).reshape(G, 1, 1)

    blk_bytes = Gb * N * S * itemsize
    # ~4x block (x double-buffer + mask_x temp + pooled) + headroom; never
    # below the 32 MiB v6e/v7x scoped default, never above v7x physical VMEM.
    vmem_limit = min(64 * 1024 * 1024,
                     max(32 * 1024 * 1024, 4 * blk_bytes + (8 << 20)))

    cost = pl.CostEstimate(
        flops=int(G * N * S * (2 * (K + 1) + 4)),
        transcendentals=int(2 * G),
        bytes_accessed=int((x3.size + G * N * K + w_full.size + b_full.size
                            + pool_mat.size) * 4),
    )

    out3 = pl.pallas_call(
        functools.partial(_sar_kernel, w_out=w_out, precision=precision),
        out_shape=jax.ShapeDtypeStruct((G, N, K), x.dtype),
        grid=(grid,),
        in_specs=[
            pl.BlockSpec((Gb, N, S), lambda g: (g, 0, 0)),
            pl.BlockSpec((Gb, N, 1), lambda g: (g, 0, 0)),   # per-group weights
            pl.BlockSpec((Gb, 1, 1), lambda g: (g, 0, 0)),   # per-group bias
            pl.BlockSpec((S, K + 1), lambda g: (0, 0)),      # resident pool matrix
        ],
        out_specs=pl.BlockSpec((Gb, N, K), lambda g: (g, 0, 0)),
        compiler_params=pltpu.CompilerParams(
            dimension_semantics=("parallel",),
            vmem_limit_bytes=int(vmem_limit)),
        cost_estimate=cost,
    )(x3, w_full, b_full, pool_mat)

    return out3.reshape(B, C, N, w_out, w_out)


def _reference(x, weight, bias, w_out):
    """Pure-JAX reference mirroring the PyTorch forward."""
    B, C, N, H, W = x.shape
    mask = jnp.einsum(
        "cn,bcnhw->bchw", weight, x, precision=jax.lax.Precision.HIGHEST
    ) + bias[None, :, None, None]
    mask_x = mask[:, :, None, :, :] * x
    P1 = jnp.asarray(_adaptive_pool_matrix_1d(H, w_out))
    pooled = jnp.einsum(
        "bcnhw,hp,wq->bcnpq", mask_x, P1, P1,
        precision=jax.lax.Precision.HIGHEST,
    )
    if w_out == 1:
        xq = jnp.sum(pooled ** 2, axis=2, keepdims=True)
        return xq / (1.0 + xq) * (pooled / jnp.sqrt(xq + 1e-7))
    else:
        m2 = jnp.mean(pooled, axis=(3, 4), keepdims=True)
        xq = jnp.sum(m2 ** 2, axis=2, keepdims=True)
        return (jnp.sqrt(xq) / (1.0 + xq)) * pooled


if __name__ == "__main__":
    B, ch_in, n_in, w_in = 2, 4, 8, 16

    key = jax.random.PRNGKey(0)
    kx, kw, kb = jax.random.split(key, 3)
    x = jax.random.normal(kx, (B, ch_in, n_in, w_in, w_in), dtype=jnp.float32)

    # deterministic synthetic params for nn.Conv2d(ch_in*n_in, ch_in, 1, groups=ch_in)
    # -> weight (ch_in, n_in), bias (ch_in,)
    bound = 1.0 / float(np.sqrt(n_in))
    weight = jax.random.uniform(kw, (ch_in, n_in), jnp.float32, -bound, bound)
    bias = jax.random.uniform(kb, (ch_in,), jnp.float32, -bound, bound)

    # exercise both branches of the module (w_out > 1 and w_out == 1)
    for w_out in (4, 1):
        out = self_attention_routing(x, weight, bias, w_out)
        out = jax.block_until_ready(out)
        ref = _reference(x, weight, bias, w_out)
        np.testing.assert_allclose(
            np.asarray(out), np.asarray(ref), rtol=1e-4, atol=1e-4
        )

    print("KERNEL_OK")
</pallas_src>

<mosaic_0001>
module attributes {stable_mosaic.version = 11 : i64} {
  func.func @_sar_kernel(%arg0: i32, %arg1: memref<2x8x256xf32, #tpu.memory_space<vmem>>, %arg2: memref<2x8x1xf32, #tpu.memory_space<vmem>>, %arg3: memref<2x1x1xf32, #tpu.memory_space<vmem>>, %arg4: memref<256x17xf32, #tpu.memory_space<vmem>>, %arg5: memref<2x8x16xf32, #tpu.memory_space<vmem>>) attributes {dimension_semantics = [#tpu.dimension_semantics<parallel>], iteration_bounds = array<i64: 4>, scalar_prefetch = 0 : i64, scratch_operands = 0 : i64, tpu.core_type = #tpu.core_type<tc>, window_params = [{transform_indices = @transform_0, window_bounds = array<i64: 2, 8, 256>}, {transform_indices = @transform_1, window_bounds = array<i64: 2, 8, 1>}, {transform_indices = @transform_2, window_bounds = array<i64: 2, 1, 1>}, {pipeline_mode = #tpu.pipeline_mode<synchronous>, transform_indices = @transform_3, window_bounds = array<i64: 256, 17>}, {transform_indices = @transform_4, window_bounds = array<i64: 2, 8, 16>}]} {
    %c0 = arith.constant 0 : index
    %c0_0 = arith.constant 0 : index
    %c0_1 = arith.constant 0 : index
    %0 = vector.load %arg1[%c0, %c0_0, %c0_1] : memref<2x8x256xf32, #tpu.memory_space<vmem>>, vector<2x8x256xf32>
    %c0_2 = arith.constant 0 : index
    %c0_3 = arith.constant 0 : index
    %c0_4 = arith.constant 0 : index
    %1 = vector.load %arg2[%c0_2, %c0_3, %c0_4] : memref<2x8x1xf32, #tpu.memory_space<vmem>>, vector<2x8x1xf32>
    %2 = vector.broadcast %1 : vector<2x8x1xf32> to vector<2x8x256xf32>
    %3 = arith.mulf %2, %0 : vector<2x8x256xf32>
    %cst = arith.constant dense<0.000000e+00> : vector<2x256xf32>
    %4 = vector.multi_reduction <add>, %3, %cst [1] : vector<2x8x256xf32> to vector<2x256xf32>
    %5 = vector.shape_cast %4 : vector<2x256xf32> to vector<2x1x256xf32>
    %c0_5 = arith.constant 0 : index
    %c0_6 = arith.constant 0 : index
    %c0_7 = arith.constant 0 : index
    %6 = vector.load %arg3[%c0_5, %c0_6, %c0_7] : memref<2x1x1xf32, #tpu.memory_space<vmem>>, vector<2x1x1xf32>
    %7 = vector.broadcast %6 : vector<2x1x1xf32> to vector<2x1x256xf32>
    %8 = arith.addf %5, %7 : vector<2x1x256xf32>
    %9 = vector.broadcast %8 : vector<2x1x256xf32> to vector<2x8x256xf32>
    %10 = arith.mulf %9, %0 : vector<2x8x256xf32>
    %11 = vector.shape_cast %10 : vector<2x8x256xf32> to vector<16x256xf32>
    %c0_8 = arith.constant 0 : index
    %c0_9 = arith.constant 0 : index
    %12 = vector.load %arg4[%c0_8, %c0_9] : memref<256x17xf32, #tpu.memory_space<vmem>>, vector<256x17xf32>
    %cst_10 = arith.constant dense<0.000000e+00> : vector<16x17xf32>
    %13 = tpu.matmul %11, %12, %cst_10 {dimension_numbers = #tpu.dot_dimension_numbers<[1], [0], [0], [1], [0, 0, 1, 1], [], []>, precision = #tpu.contract_precision<fp32>} : vector<16x256xf32>, vector<256x17xf32>, vector<16x17xf32> -> vector<16x17xf32>
    %14 = vector.extract_strided_slice %13 {offsets = [0, 0], sizes = [16, 16], strides = [1, 1]} : vector<16x17xf32> to vector<16x16xf32>
    %15 = vector.shape_cast %14 : vector<16x16xf32> to vector<2x8x16xf32>
    %16 = vector.extract_strided_slice %13 {offsets = [0, 16], sizes = [16, 1], strides = [1, 1]} : vector<16x17xf32> to vector<16x1xf32>
    %17 = vector.shape_cast %16 : vector<16x1xf32> to vector<2x8x1xf32>
    %18 = arith.mulf %17, %17 : vector<2x8x1xf32>
    %cst_11 = arith.constant dense<0.000000e+00> : vector<2x1xf32>
    %19 = vector.multi_reduction <add>, %18, %cst_11 [1] : vector<2x8x1xf32> to vector<2x1xf32>
    %20 = vector.shape_cast %19 : vector<2x1xf32> to vector<2x1x1xf32>
    %21 = math.sqrt %20 : vector<2x1x1xf32>
    %cst_12 = arith.constant 1.000000e+00 : f32
    %22 = vector.broadcast %cst_12 : f32 to vector<2x1x1xf32>
    %23 = arith.addf %22, %20 : vector<2x1x1xf32>
    %24 = arith.divf %21, %23 : vector<2x1x1xf32>
    %25 = vector.broadcast %24 : vector<2x1x1xf32> to vector<2x8x16xf32>
    %26 = arith.mulf %25, %15 : vector<2x8x16xf32>
    %c0_13 = arith.constant 0 : index
    %c0_14 = arith.constant 0 : index
    %c0_15 = arith.constant 0 : index
    %27 = vector.load %arg5[%c0_13, %c0_14, %c0_15] : memref<2x8x16xf32, #tpu.memory_space<vmem>>, vector<2x8x16xf32>
    tpu.vector_store %arg5[%c0_13, %c0_14, %c0_15], %26 {strides = array<i32>} : memref<2x8x16xf32, #tpu.memory_space<vmem>>, vector<2x8x16xf32>,
    return
  }
  func.func @transform_0(%arg0: i32) -> (i32, i32, i32) {
    %c0_i32 = arith.constant 0 : i32
    %c0_i32_0 = arith.constant 0 : i32
    %c0_i32_1 = arith.constant 0 : i32
    return %arg0, %c0_i32, %c0_i32_0 : i32, i32, i32
  }
  func.func @transform_1(%arg0: i32) -> (i32, i32, i32) {
    %c0_i32 = arith.constant 0 : i32
    %c0_i32_0 = arith.constant 0 : i32
    %c0_i32_1 = arith.constant 0 : i32
    return %arg0, %c0_i32, %c0_i32_0 : i32, i32, i32
  }
  func.func @transform_2(%arg0: i32) -> (i32, i32, i32) {
    %c0_i32 = arith.constant 0 : i32
    %c0_i32_0 = arith.constant 0 : i32
    %c0_i32_1 = arith.constant 0 : i32
    return %arg0, %c0_i32, %c0_i32_0 : i32, i32, i32
  }
  func.func @transform_3(%arg0: i32) -> (i32, i32) {
    %c0_i32 = arith.constant 0 : i32
    %c0_i32_0 = arith.constant 0 : i32
    %c0_i32_1 = arith.constant 0 : i32
    return %c0_i32, %c0_i32_0 : i32, i32
  }
  func.func @transform_4(%arg0: i32) -> (i32, i32, i32) {
    %c0_i32 = arith.constant 0 : i32
    %c0_i32_0 = arith.constant 0 : i32
    %c0_i32_1 = arith.constant 0 : i32
    return %arg0, %c0_i32, %c0_i32_0 : i32, i32, i32
  }
}

</mosaic_0001>

<llo_original>
// kernel: tpu_custom_call.1
$region0: #{tpu_custom_call.1}
  #allocation0 [shape = 'u32[]', space=smem, size = 0x4, offset = 0x4, fixed_abs, tag = 'smem constant byte address 0x4 - core index']
  #allocation1 [shape = 'u32[144,128]{1,0:T(1,128)}', space=vmem, size = 0x12000, scoped, tag = 'internal scratch']
  %s0 = inlined_call_operand.vmem [shape: f32[8,8,256], index: 0, kind: input, shape index: {}]
  %s1 = inlined_call_operand.vmem [shape: f32[8,8,1], index: 1, kind: input, shape index: {}]
  %s2 = inlined_call_operand.vmem [shape: f32[8,1,1], index: 2, kind: input, shape index: {}]
  %s3 = inlined_call_operand.vmem [shape: f32[256,17], index: 3, kind: input, shape index: {}]
  %s4 = inlined_call_operand.hbm [shape: f32[8,8,16], index: 4, kind: output, shape index: {}]
  %s5 = sld [smem:[#allocation0]]
  $region49: #{tpu_custom_call.1} parent=0
    _
  %s7 = ssub.s32 1, %s5
  %s8 = scalar_select 0, %s7, %s5
  $region1: #{tpu_custom_call.1} parent=0
    #allocation2 [shape = 'u8[16384]{0}', space=vmem, size = 0x4000, scoped, tag = 'output window, operand 0']
    #allocation3 [shape = 's32[2]{0}', space=sflag, size = 0x8, scoped, tag = 'scoped memory for tpu_custom_call.1']
    %9 = vsyncpa [#allocation3], 0
    %s10 = scalar_lea.sflag [#allocation3], 1
    %11 = vsyncpa %s10, 0
    loop: start=0, step=1, limit=6
    $region2: #{tpu_custom_call.1} parent=1 // loop_pre_header
      _
    $region3: #{tpu_custom_call.1} parent=1 // loop_header
      %s13 = sphi 0, %s17
      %p14 = scmp.ge.s32.totalorder %s13, 6
      %s23 = sphi 0, %s25
      %s26 = sphi 0, %s23
      %s27 = sphi 0, %s26
      %s43 = sphi 0, %s27
      %s49 = sphi 0, %s51
      %s52 = sphi 0, %s49
      %s53 = sphi 0, %s52
      %s69 = sphi 0, %s53
      %s75 = sphi 0, %s77
      %s78 = sphi 0, %s75
      %s79 = sphi 0, %s78
      %s95 = sphi 0, %s79
      %s99 = sphi 0, %s99
      %s101 = sphi 0, %s99
      %s102 = sphi 0, %s101
      %s116 = sphi 0, %s102
      %s122 = sphi 0, %s124
      %s125 = sphi 0, %s122
      %s126 = sphi 0, %s125
      %s142 = sphi 0, %s126
    $region4: #{tpu_custom_call.1} parent=1 // loop_header_branch
      %16 = sbr.rel (%p14) target = $region8
    $region5: #{tpu_custom_call.1} parent=1 // loop_body
      %s18 = ssub.s32 %s13, 1
      %s19 = ssub.s32 %s13, 2
      %s20 = sadd.s32 %s13, 1
      %s21 = ssub.s32 %s13, %s20
      %p22 = scmp.eq.s32.totalorder %s21, 0
      %s24 = sadd.s32 %s23, 1
      %s25 = scalar_select %p22, %s23, %s24
      %p28 = pneg %p22
      %p29 = scmp.eq.s32.totalorder %s13, 3
      %p30 = por %p28, %p29
      %p31 = scmp.ne.s32.totalorder %s23, %s26
      %p32 = scmp.eq.s32.totalorder %s13, 0
      %p33 = por %p31, %p32
      %p34 = scmp.ne.s32.totalorder %s23, %s26
      %p35 = scmp.eq.s32.totalorder %s18, 3
      %p36 = por %p34, %p35
      %p37 = scmp.ne.s32.totalorder %s26, %s27
      %p38 = scmp.eq.s32.totalorder %s18, 0
      %p39 = por %p37, %p38
      %p40 = scmp.ne.s32.totalorder %s26, %s27
      %p41 = scmp.eq.s32.totalorder %s19, 3
      %p42 = por %p40, %p41
      %p44 = scmp.ne.s32.totalorder %s27, %s43
      %p45 = scmp.eq.s32.totalorder %s19, 0
      %p46 = por %p44, %p45
      %s47 = ssub.s32 %s13, %s20
      %p48 = scmp.eq.s32.totalorder %s47, 0
      %s50 = sadd.s32 %s49, 1
      %s51 = scalar_select %p48, %s49, %s50
      %p54 = pneg %p48
      %p55 = scmp.eq.s32.totalorder %s13, 3
      %p56 = por %p54, %p55
      %p57 = scmp.ne.s32.totalorder %s49, %s52
      %p58 = scmp.eq.s32.totalorder %s13, 0
      %p59 = por %p57, %p58
      %p60 = scmp.ne.s32.totalorder %s49, %s52
      %p61 = scmp.eq.s32.totalorder %s18, 3
      %p62 = por %p60, %p61
      %p63 = scmp.ne.s32.totalorder %s52, %s53
      %p64 = scmp.eq.s32.totalorder %s18, 0
      %p65 = por %p63, %p64
      %p66 = scmp.ne.s32.totalorder %s52, %s53
      %p67 = scmp.eq.s32.totalorder %s19, 3
      %p68 = por %p66, %p67
      %p70 = scmp.ne.s32.totalorder %s53, %s69
      %p71 = scmp.eq.s32.totalorder %s19, 0
      %p72 = por %p70, %p71
      %s73 = ssub.s32 %s13, %s20
      %p74 = scmp.eq.s32.totalorder %s73, 0
      %s76 = sadd.s32 %s75, 1
      %s77 = scalar_select %p74, %s75, %s76
      %p80 = pneg %p74
      %p81 = scmp.eq.s32.totalorder %s13, 3
      %p82 = por %p80, %p81
      %p83 = scmp.ne.s32.totalorder %s75, %s78
      %p84 = scmp.eq.s32.totalorder %s13, 0
      %p85 = por %p83, %p84
      %p86 = scmp.ne.s32.totalorder %s75, %s78
      %p87 = scmp.eq.s32.totalorder %s18, 3
      %p88 = por %p86, %p87
      %p89 = scmp.ne.s32.totalorder %s78, %s79
      %p90 = scmp.eq.s32.totalorder %s18, 0
      %p91 = por %p89, %p90
      %p92 = scmp.ne.s32.totalorder %s78, %s79
      %p93 = scmp.eq.s32.totalorder %s19, 3
      %p94 = por %p92, %p93
      %p96 = scmp.ne.s32.totalorder %s79, %s95
      %p97 = scmp.eq.s32.totalorder %s19, 0
      %p98 = por %p96, %p97
      %s100 = sadd.s32 %s99, 1
      %p103 = scmp.eq.s32.totalorder %s13, 3
      %p104 = scmp.ne.s32.totalorder %s99, %s101
      %p105 = scmp.eq.s32.totalorder %s13, 0
      %p106 = por %p104, %p105
      %p107 = scmp.ne.s32.totalorder %s99, %s101
      %p108 = scmp.eq.s32.totalorder %s18, 3
      %p109 = por %p107, %p108
      %p110 = scmp.ne.s32.totalorder %s101, %s102
      %p111 = scmp.eq.s32.totalorder %s18, 0
      %p112 = por %p110, %p111
      %p113 = scmp.ne.s32.totalorder %s101, %s102
      %p114 = scmp.eq.s32.totalorder %s19, 3
      %p115 = por %p113, %p114
      %p117 = scmp.ne.s32.totalorder %s102, %s116
      %p118 = scmp.eq.s32.totalorder %s19, 0
      %p119 = por %p117, %p118
      %s120 = ssub.s32 %s13, %s20
      %p121 = scmp.eq.s32.totalorder %s120, 0
      %s123 = sadd.s32 %s122, 1
      %s124 = scalar_select %p121, %s122, %s123
      %p127 = pneg %p121
      %p128 = scmp.eq.s32.totalorder %s13, 3
      %p129 = por %p127, %p128
      %p130 = scmp.ne.s32.totalorder %s122, %s125
      %p131 = scmp.eq.s32.totalorder %s13, 0
      %p132 = por %p130, %p131
      %p133 = scmp.ne.s32.totalorder %s122, %s125
      %p134 = scmp.eq.s32.totalorder %s18, 3
      %p135 = por %p133, %p134
      %p136 = scmp.ne.s32.totalorder %s125, %s126
      %p137 = scmp.eq.s32.totalorder %s18, 0
      %p138 = por %p136, %p137
      %p139 = scmp.ne.s32.totalorder %s125, %s126
      %p140 = scmp.eq.s32.totalorder %s19, 3
      %p141 = por %p139, %p140
      %p143 = scmp.ne.s32.totalorder %s126, %s142
      %p144 = scmp.eq.s32.totalorder %s19, 0
      %p145 = por %p143, %p144
      %p146 = scmp.le.s32.totalorder 1, %s13
      %p147 = scmp.lt.s32.totalorder %s13, 5
      %p148 = pnand %p146, %p147
      %p149 = pneg %p148
      // Predicated region
      $region9: #{tpu_custom_call.1} parent=5 // pred_check
        _
      $region10: #{tpu_custom_call.1} parent=5 // pred_check_branch
        %151 = sbr.rel (%p148) target = $region12
      $region11: #{tpu_custom_call.1} parent=5 // pred_region
        %s152 = ssub.s32 %s13, 1
        // Predicated region
        $region13: #{tpu_custom_call.1} parent=11 // pred_check
          %p153 = pneg %p112
        $region14: #{tpu_custom_call.1} parent=11 // pred_check_branch
          %155 = sbr.rel (%p153) target = $region16
        $region15: #{tpu_custom_call.1} parent=11 // pred_region
          _
        $region16: #{tpu_custom_call.1} parent=11 // pred_fallthru
          _
      $region12: #{tpu_custom_call.1} parent=5 // pred_fallthru
        _
      %p156 = scmp.lt.s32.totalorder %s13, 4
      // Predicated region
      $region17: #{tpu_custom_call.1} parent=5 // pred_check
        %p157 = pneg %p156
      $region18: #{tpu_custom_call.1} parent=5 // pred_check_branch
        %159 = sbr.rel (%p157) target = $region20
      $region19: #{tpu_custom_call.1} parent=5 // pred_region
        // Predicated region
        $region21: #{tpu_custom_call.1} parent=19 // pred_check
          %p160 = pneg %p33
        $region22: #{tpu_custom_call.1} parent=19 // pred_check_branch
          %162 = sbr.rel (%p160) target = $region24
        $region23: #{tpu_custom_call.1} parent=19 // pred_region
          %s163 = smul.u32 2, %s13
          %p164 = scmp.lt.s32.totalorder %s163, 7
          %s165 = scalar_select %p164, %s163, 7
          %s166 = smul.addr %s165, 2
          %s167 = smul.addr %s166, 8
          %s168 = scalar_lea.vmem %s0, %s167
          %s169 = smul.u32 2, %s13
        $region24: #{tpu_custom_call.1} parent=19 // pred_fallthru
          _
        // Predicated region
        $region25: #{tpu_custom_call.1} parent=19 // pred_check
          %p170 = pneg %p59
        $region26: #{tpu_custom_call.1} parent=19 // pred_check_branch
          %172 = sbr.rel (%p170) target = $region28
        $region27: #{tpu_custom_call.1} parent=19 // pred_region
          %s173 = smul.u32 2, %s13
          %p174 = scmp.lt.s32.totalorder %s173, 7
          %s175 = scalar_select %p174, %s173, 7
          %s176 = smul.addr %s175, 8
          %s177 = scalar_lea.vmem %s1, %s176
          %s178 = smul.u32 2, %s13
        $region28: #{tpu_custom_call.1} parent=19 // pred_fallthru
          _
        // Predicated region
        $region29: #{tpu_custom_call.1} parent=19 // pred_check
          %p179 = pneg %p85
        $region30: #{tpu_custom_call.1} parent=19 // pred_check_branch
          %181 = sbr.rel (%p179) target = $region32
        $region31: #{tpu_custom_call.1} parent=19 // pred_region
          %s182 = smul.u32 2, %s13
          %p183 = scmp.lt.s32.totalorder %s182, 7
          %s184 = scalar_select %p183, %s182, 7
          %s185 = scalar_lea.vmem %s2, %s184
          %s186 = smul.u32 2, %s13
        $region32: #{tpu_custom_call.1} parent=19 // pred_fallthru
          _
      $region20: #{tpu_custom_call.1} parent=5 // pred_fallthru
        _
      %p187 = scmp.le.s32.totalorder 1, %s13
      %p188 = scmp.lt.s32.totalorder %s13, 5
      %p189 = pnand %p187, %p188
      %p190 = pneg %p189
      // Predicated region
      $region33: #{tpu_custom_call.1} parent=5 // pred_check
        _
      $region34: #{tpu_custom_call.1} parent=5 // pred_check_branch
        %192 = sbr.rel (%p189) target = $region36
      $region35: #{tpu_custom_call.1} parent=5 // pred_region
        %s193 = ssub.s32 %s13, 1
        %s194 = smul.u32 2, %s18
        %p195 = scmp.lt.s32.totalorder %s194, 7
        %s196 = scalar_select %p195, %s194, 7
        %s197 = smul.addr %s196, 2
        %s198 = smul.addr %s197, 8
        %s199 = scalar_lea.vmem %s0, %s198
        %p200 = pneg %p39
        %p201 = pneg %p36
        %s202 = smul.u32 2, %s18
        %p203 = scmp.lt.s32.totalorder %s202, 7
        %s204 = scalar_select %p203, %s202, 7
        %s205 = smul.addr %s204, 8
        %s206 = scalar_lea.vmem %s1, %s205
        %p207 = pneg %p65
        %p208 = pneg %p62
        %s209 = smul.u32 2, %s18
        %p210 = scmp.lt.s32.totalorder %s209, 7
        %s211 = scalar_select %p210, %s209, 7
        %s212 = scalar_lea.vmem %s2, %s211
        %p213 = pneg %p91
        %p214 = pneg %p88
        %p215 = pneg %p112
        %p216 = pneg %p109
        %p217 = pneg %p138
        %p218 = pneg %p135
        %s219 = sand.u32 %s125, 1
        %s220 = scalar_lea.sflag [#allocation3], %s219
        %s221 = sand.u32 %s125, 1
        %s222 = smul.addr %s221, 16
        %s223 = scalar_lea.vmem [#allocation2], %s222
        %s224 = smul.u32 2, %s18
        %p225 = scmp.lt.s32.totalorder %s224, 7
        %s226 = scalar_select %p225, %s224, 7
        %s227 = smul.addr %s226, 2
        %s228 = smul.addr %s227, 8
        %s229 = scalar_lea.vmem %s0, %s228
        %s230 = smul.u32 2, %s18
        %s231 = smul.u32 2, %s18
        %p232 = scmp.lt.s32.totalorder %s231, 7
        %s233 = scalar_select %p232, %s231, 7
        %s234 = smul.addr %s233, 8
        %s235 = scalar_lea.vmem %s1, %s234
        %s236 = smul.u32 2, %s18
        %s237 = smul.u32 2, %s18
        %p238 = scmp.lt.s32.totalorder %s237, 7
        %s239 = scalar_select %p238, %s237, 7
        %s240 = scalar_lea.vmem %s2, %s239
        %s241 = smul.u32 2, %s18
        %s242 = smul.u32 2, %s18
        %v243 = vld [vmem:[%s229] sm:$0xff]
        %v244 = vld [vmem:[%s229 + $0x8] sm:$0xff]
        %v245 = vld [vmem:[%s229 + $0x10] sm:$0xff]
        %v246 = vld [vmem:[%s229 + $0x18] sm:$0xff]
        %v247 = vld [vmem:[%s235] sm:$0xff]
        %v248 = vld [vmem:[%s235 + $0x8] sm:$0xff]
        %250 = vset.pattern.permute.xlu0 0
        %251 = vperm.xlu0 %250, %v247
        %v252 = vpop.permute.xlu0 %251
        %255 = vset.pattern.permute.xlu0 0
        %256 = vperm.xlu0 %255, %v248
        %v257 = vpop.permute.xlu0 %256
        %v259 = vmul.f32 %v252, %v243
        %v260 = vmul.f32 %v252, %v244
        %v261 = vmul.f32 %v257, %v245
        %v262 = vmul.f32 %v257, %v246
        %v263 = vrot.slane %v259, 4
        %v264 = vadd.f32 %v259, %v263
        %v265 = vrot.slane %v264, 2
        %v266 = vadd.f32 %v264, %v265
        %v267 = vrot.slane %v266, 1
        %v268 = vadd.f32 %v266, %v267
        %v269 = vrot.slane %v260, 4
        %v270 = vadd.f32 %v260, %v269
        %v271 = vrot.slane %v270, 2
        %v272 = vadd.f32 %v270, %v271
        %v273 = vrot.slane %v272, 1
        %v274 = vadd.f32 %v272, %v273
        %v275 = vrot.slane %v261, 4
        %v276 = vadd.f32 %v261, %v275
        %v277 = vrot.slane %v276, 2
        %v278 = vadd.f32 %v276, %v277
        %v279 = vrot.slane %v278, 1
        %v280 = vadd.f32 %v278, %v279
        %v281 = vrot.slane %v262, 4
        %v282 = vadd.f32 %v262, %v281
        %v283 = vrot.slane %v282, 2
        %v284 = vadd.f32 %v282, %v283
        %v285 = vrot.slane %v284, 1
        %v286 = vadd.f32 %v284, %v285
        %v287 = vld [vmem:[%s240] sm:$0x1]
        %v288 = vld [vmem:[%s240 + $0x1] sm:$0x1]
        %290 = vset.pattern.permute.xlu0 0
        %291 = vperm.xlu0 %290, %v287
        %v292 = vpop.permute.xlu0 %291
        %v294 = vlaneseq
        %v295 = vshrl.u32 %v294, 7
        %v296 = vsub.s32 0, %v295
        %v297 = vrot.slane %v292, %v296
        %299 = vset.pattern.permute.xlu0 0
        %300 = vperm.xlu0 %299, %v288
        %v301 = vpop.permute.xlu0 %300
        %v303 = vlaneseq
        %v304 = vshrl.u32 %v303, 7
        %v305 = vsub.s32 0, %v304
        %v306 = vrot.slane %v301, %v305
        %v307 = vadd.f32 %v268, %v297
        %v308 = vadd.f32 %v274, %v297
        %v309 = vadd.f32 %v280, %v306
        %v310 = vadd.f32 %v286, %v306
        %v311 = vmul.f32 %v307, %v243
        %v312 = vmul.f32 %v308, %v244
        %v313 = vmul.f32 %v309, %v245
        %v314 = vmul.f32 %v310, %v246
        %v315 = vld [vmem:[%s3] sm:$0xff]
        %v316 = vld [vmem:[%s3 + $0x8] sm:$0xff]
        %v317 = vld [vmem:[%s3 + $0x10] sm:$0xff]
        %v318 = vld [vmem:[%s3 + $0x18] sm:$0xff]
        %v319 = vld [vmem:[%s3 + $0x20] sm:$0xff]
        %v320 = vld [vmem:[%s3 + $0x28] sm:$0xff]
        %v321 = vld [vmem:[%s3 + $0x30] sm:$0xff]
        %v322 = vld [vmem:[%s3 + $0x38] sm:$0xff]
        %v323 = vld [vmem:[%s3 + $0x40] sm:$0xff]
        %v324 = vld [vmem:[%s3 + $0x48] sm:$0xff]
        %v325 = vld [vmem:[%s3 + $0x50] sm:$0xff]
        %v326 = vld [vmem:[%s3 + $0x58] sm:$0xff]
        %v327 = vld [vmem:[%s3 + $0x60] sm:$0xff]
        %v328 = vld [vmem:[%s3 + $0x68] sm:$0xff]
        %v329 = vld [vmem:[%s3 + $0x70] sm:$0xff]
        %v330 = vld [vmem:[%s3 + $0x78] sm:$0xff]
        %v331 = vld [vmem:[%s3 + $0x80] sm:$0xff]
        %v332 = vld [vmem:[%s3 + $0x88] sm:$0xff]
        %v333 = vld [vmem:[%s3 + $0x90] sm:$0xff]
        %v334 = vld [vmem:[%s3 + $0x98] sm:$0xff]
        %v335 = vld [vmem:[%s3 + $0xa0] sm:$0xff]
        %v336 = vld [vmem:[%s3 + $0xa8] sm:$0xff]
        %v337 = vld [vmem:[%s3 + $0xb0] sm:$0xff]
        %v338 = vld [vmem:[%s3 + $0xb8] sm:$0xff]
        %v339 = vld [vmem:[%s3 + $0xc0] sm:$0xff]
        %v340 = vld [vmem:[%s3 + $0xc8] sm:$0xff]
        %v341 = vld [vmem:[%s3 + $0xd0] sm:$0xff]
        %v342 = vld [vmem:[%s3 + $0xd8] sm:$0xff]
        %v343 = vld [vmem:[%s3 + $0xe0] sm:$0xff]
        %v344 = vld [vmem:[%s3 + $0xe8] sm:$0xff]
        %v345 = vld [vmem:[%s3 + $0xf0] sm:$0xff]
        %v346 = vld [vmem:[%s3 + $0xf8] sm:$0xff]
        %347 = vmatprep.subr.mxu0 0.0
        %v348 = vand.u32 %v315, 4294901760
        %349 = vmatpush1.msra.mxu0 %v348
        %350 = vmatprep.subr.mxu0 0.0
        %v351 = vand.u32 %v316, 4294901760
        %352 = vmatpush1.msra.mxu0 %v351
        %353 = vmatprep.subr.mxu0 0.0
        %v354 = vand.u32 %v317, 4294901760
        %355 = vmatpush1.msra.mxu0 %v354
        %356 = vmatprep.subr.mxu0 0.0
        %v357 = vand.u32 %v318, 4294901760
        %358 = vmatpush1.msra.mxu0 %v357
        %359 = vmatprep.subr.mxu0 0.0
        %v360 = vand.u32 %v319, 4294901760
        %361 = vmatpush1.msra.mxu0 %v360
        %362 = vmatprep.subr.mxu0 0.0
        %v363 = vand.u32 %v320, 4294901760
        %364 = vmatpush1.msra.mxu0 %v363
        %365 = vmatprep.subr.mxu0 0.0
        %v366 = vand.u32 %v321, 4294901760
        %367 = vmatpush1.msra.mxu0 %v366
        %368 = vmatprep.subr.mxu0 0.0
        %v369 = vand.u32 %v322, 4294901760
        %370 = vmatpush1.msra.mxu0 %v369
        %371 = vmatprep.subr.mxu0 0.0
        %v372 = vand.u32 %v323, 4294901760
        %373 = vmatpush1.msra.mxu0 %v372
        %374 = vmatprep.subr.mxu0 0.0
        %v375 = vand.u32 %v324, 4294901760
        %376 = vmatpush1.msra.mxu0 %v375
        %377 = vmatprep.subr.mxu0 0.0
        %v378 = vand.u32 %v325, 4294901760
        %379 = vmatpush1.msra.mxu0 %v378
        %380 = vmatprep.subr.mxu0 0.0
        %v381 = vand.u32 %v326, 4294901760
        %382 = vmatpush1.msra.mxu0 %v381
        %383 = vmatprep.subr.mxu0 0.0
        %v384 = vand.u32 %v327, 4294901760
        %385 = vmatpush1.msra.mxu0 %v384
        %386 = vmatprep.subr.mxu0 0.0
        %v387 = vand.u32 %v328, 4294901760
        %388 = vmatpush1.msra.mxu0 %v387
        %389 = vmatprep.subr.mxu0 0.0
        %v390 = vand.u32 %v329, 4294901760
        %391 = vmatpush1.msra.mxu0 %v390
        %392 = vmatprep.subr.mxu0 0.0
        %v393 = vand.u32 %v330, 4294901760
        %394 = vmatpush1.msra.mxu0 %v393
        %395 = vmatprep.subr.mxu0 0.0
        %v396 = vand.u32 %v331, 4294901760
        %397 = vmatpush1.msra.mxu0 %v396
        %398 = vmatprep.subr.mxu0 0.0
        %v399 = vand.u32 %v332, 4294901760
        %400 = vmatpush1.msra.mxu0 %v399
        %401 = vmatprep.subr.mxu0 0.0
        %v402 = vand.u32 %v333, 4294901760
        %403 = vmatpush1.msra.mxu0 %v402
        %404 = vmatprep.subr.mxu0 0.0
        %v405 = vand.u32 %v334, 4294901760
        %406 = vmatpush1.msra.mxu0 %v405
        %407 = vmatprep.subr.mxu0 0.0
        %v408 = vand.u32 %v335, 4294901760
        %409 = vmatpush1.msra.mxu0 %v408
        %410 = vmatprep.subr.mxu0 0.0
        %v411 = vand.u32 %v336, 4294901760
        %412 = vmatpush1.msra.mxu0 %v411
        %413 = vmatprep.subr.mxu0 0.0
        %v414 = vand.u32 %v337, 4294901760
        %415 = vmatpush1.msra.mxu0 %v414
        %416 = vmatprep.subr.mxu0 0.0
        %v417 = vand.u32 %v338, 4294901760
        %418 = vmatpush1.msra.mxu0 %v417
        %419 = vmatprep.subr.mxu0 0.0
        %v420 = vand.u32 %v339, 4294901760
        %421 = vmatpush1.msra.mxu0 %v420
        %422 = vmatprep.subr.mxu0 0.0
        %v423 = vand.u32 %v340, 4294901760
        %424 = vmatpush1.msra.mxu0 %v423
        %425 = vmatprep.subr.mxu0 0.0
        %v426 = vand.u32 %v341, 4294901760
        %427 = vmatpush1.msra.mxu0 %v426
        %428 = vmatprep.subr.mxu0 0.0
        %v429 = vand.u32 %v342, 4294901760
        %430 = vmatpush1.msra.mxu0 %v429
        %431 = vmatprep.subr.mxu0 0.0
        %v432 = vand.u32 %v343, 4294901760
        %433 = vmatpush1.msra.mxu0 %v432
        %434 = vmatprep.subr.mxu0 0.0
        %v435 = vand.u32 %v344, 4294901760
        %436 = vmatpush1.msra.mxu0 %v435
        %437 = vmatprep.subr.mxu0 0.0
        %v438 = vand.u32 %v345, 4294901760
        %439 = vmatpush1.msra.mxu0 %v438
        %440 = vmatprep.subr.mxu0 0.0
        %v441 = vand.u32 %v346, 4294901760
        %442 = vmatpush1.msra.mxu0 %v441
        %v443 = vand.u32 %v312, 4294901760
        %v444 = vsub.f32 %v312, %v443
        %v445 = vand.u32 %v444, 4294901760
        %v446 = vsub.f32 %v444, %v445
        %v447 = vand.u32 %v446, 4294901760
        %448 = vmatprep.mubr.f32.mxu0 %v447
        %v449 = vand.u32 %v311, 4294901760
        %v450 = vsub.f32 %v311, %v449
        %v451 = vand.u32 %v450, 4294901760
        %v452 = vsub.f32 %v450, %v451
        %v453 = vand.u32 %v452, 4294901760
        %454 = vmatmul.mubr.f32.gmra.mrb[0].mxu0 %v453
        %v455 = vpop.f32.mrb[0].mxu0
        %v456 = vadd.f32 0.0, %v455
        %v457 = vpop.f32.mrb[0].mxu0
        %v458 = vand.u32 %v314, 4294901760
        %v459 = vsub.f32 %v314, %v458
        %v460 = vand.u32 %v459, 4294901760
        %v461 = vsub.f32 %v459, %v460
        %v462 = vand.u32 %v461, 4294901760
        %463 = vmatprep.mubr.f32.mxu0 %v462
        %v464 = vand.u32 %v313, 4294901760
        %v465 = vsub.f32 %v313, %v464
        %v466 = vand.u32 %v465, 4294901760
        %v467 = vsub.f32 %v465, %v466
        %v468 = vand.u32 %v467, 4294901760
        %469 = vmatmul.mubr.f32.gmra.mrb[0].mxu0 %v468
        %v470 = vpop.f32.mrb[0].mxu0
        %v471 = vadd.f32 0.0, %v470
        %v472 = vpop.f32.mrb[0].mxu0
        %473 = vdwg.mxu0
        %474 = vmatprep.subr.mxu0 0.0
        %v475 = vand.u32 %v315, 4294901760
        %v476 = vsub.f32 %v315, %v475
        %v477 = vand.u32 %v476, 4294901760
        %v478 = vsub.f32 %v476, %v477
        %v479 = vand.u32 %v478, 4294901760
        %480 = vmatpush1.msra.mxu0 %v479
        %481 = vmatprep.subr.mxu0 0.0
        %v482 = vand.u32 %v316, 4294901760
        %v483 = vsub.f32 %v316, %v482
        %v484 = vand.u32 %v483, 4294901760
        %v485 = vsub.f32 %v483, %v484
        %v486 = vand.u32 %v485, 4294901760
        %487 = vmatpush1.msra.mxu0 %v486
        %488 = vmatprep.subr.mxu0 0.0
        %v489 = vand.u32 %v317, 4294901760
        %v490 = vsub.f32 %v317, %v489
        %v491 = vand.u32 %v490, 4294901760
        %v492 = vsub.f32 %v490, %v491
        %v493 = vand.u32 %v492, 4294901760
        %494 = vmatpush1.msra.mxu0 %v493
        %495 = vmatprep.subr.mxu0 0.0
        %v496 = vand.u32 %v318, 4294901760
        %v497 = vsub.f32 %v318, %v496
        %v498 = vand.u32 %v497, 4294901760
        %v499 = vsub.f32 %v497, %v498
        %v500 = vand.u32 %v499, 4294901760
        %501 = vmatpush1.msra.mxu0 %v500
        %502 = vmatprep.subr.mxu0 0.0
        %v503 = vand.u32 %v319, 4294901760
        %v504 = vsub.f32 %v319, %v503
        %v505 = vand.u32 %v504, 4294901760
        %v506 = vsub.f32 %v504, %v505
        %v507 = vand.u32 %v506, 4294901760
        %508 = vmatpush1.msra.mxu0 %v507
        %509 = vmatprep.subr.mxu0 0.0
        %v510 = vand.u32 %v320, 4294901760
        %v511 = vsub.f32 %v320, %v510
        %v512 = vand.u32 %v511, 4294901760
        %v513 = vsub.f32 %v511, %v512
        %v514 = vand.u32 %v513, 4294901760
        %515 = vmatpush1.msra.mxu0 %v514
        %516 = vmatprep.subr.mxu0 0.0
        %v517 = vand.u32 %v321, 4294901760
        %v518 = vsub.f32 %v321, %v517
        %v519 = vand.u32 %v518, 4294901760
        %v520 = vsub.f32 %v518, %v519
        %v521 = vand.u32 %v520, 4294901760
        %522 = vmatpush1.msra.mxu0 %v521
        %523 = vmatprep.subr.mxu0 0.0
        %v524 = vand.u32 %v322, 4294901760
        %v525 = vsub.f32 %v322, %v524
        %v526 = vand.u32 %v525, 4294901760
        %v527 = vsub.f32 %v525, %v526
        %v528 = vand.u32 %v527, 4294901760
        %529 = vmatpush1.msra.mxu0 %v528
        %530 = vmatprep.subr.mxu0 0.0
        %v531 = vand.u32 %v323, 4294901760
        %v532 = vsub.f32 %v323, %v531
        %v533 = vand.u32 %v532, 4294901760
        %v534 = vsub.f32 %v532, %v533
        %v535 = vand.u32 %v534, 4294901760
        %536 = vmatpush1.msra.mxu0 %v535
        %537 = vmatprep.subr.mxu0 0.0
        %v538 = vand.u32 %v324, 4294901760
        %v539 = vsub.f32 %v324, %v538
        %v540 = vand.u32 %v539, 4294901760
        %v541 = vsub.f32 %v539, %v540
        %v542 = vand.u32 %v541, 4294901760
        %543 = vmatpush1.msra.mxu0 %v542
        %544 = vmatprep.subr.mxu0 0.0
        %v545 = vand.u32 %v325, 4294901760
        %v546 = vsub.f32 %v325, %v545
        %v547 = vand.u32 %v546, 4294901760
        %v548 = vsub.f32 %v546, %v547
        %v549 = vand.u32 %v548, 4294901760
        %550 = vmatpush1.msra.mxu0 %v549
        %551 = vmatprep.subr.mxu0 0.0
        %v552 = vand.u32 %v326, 4294901760
        %v553 = vsub.f32 %v326, %v552
        %v554 = vand.u32 %v553, 4294901760
        %v555 = vsub.f32 %v553, %v554
        %v556 = vand.u32 %v555, 4294901760
        %557 = vmatpush1.msra.mxu0 %v556
        %558 = vmatprep.subr.mxu0 0.0
        %v559 = vand.u32 %v327, 4294901760
        %v560 = vsub.f32 %v327, %v559
        %v561 = vand.u32 %v560, 4294901760
        %v562 = vsub.f32 %v560, %v561
        %v563 = vand.u32 %v562, 4294901760
        %564 = vmatpush1.msra.mxu0 %v563
        %565 = vmatprep.subr.mxu0 0.0
        %v566 = vand.u32 %v328, 4294901760
        %v567 = vsub.f32 %v328, %v566
        %v568 = vand.u32 %v567, 4294901760
        %v569 = vsub.f32 %v567, %v568
        %v570 = vand.u32 %v569, 4294901760
        %571 = vmatpush1.msra.mxu0 %v570
        %572 = vmatprep.subr.mxu0 0.0
        %v573 = vand.u32 %v329, 4294901760
        %v574 = vsub.f32 %v329, %v573
        %v575 = vand.u32 %v574, 4294901760
        %v576 = vsub.f32 %v574, %v575
        %v577 = vand.u32 %v576, 4294901760
        %578 = vmatpush1.msra.mxu0 %v577
        %579 = vmatprep.subr.mxu0 0.0
        %v580 = vand.u32 %v330, 4294901760
        %v581 = vsub.f32 %v330, %v580
        %v582 = vand.u32 %v581, 4294901760
        %v583 = vsub.f32 %v581, %v582
        %v584 = vand.u32 %v583, 4294901760
        %585 = vmatpush1.msra.mxu0 %v584
        %586 = vmatprep.subr.mxu0 0.0
        %v587 = vand.u32 %v331, 4294901760
        %v588 = vsub.f32 %v331, %v587
        %v589 = vand.u32 %v588, 4294901760
        %v590 = vsub.f32 %v588, %v589
        %v591 = vand.u32 %v590, 4294901760
        %592 = vmatpush1.msra.mxu0 %v591
        %593 = vmatprep.subr.mxu0 0.0
        %v594 = vand.u32 %v332, 4294901760
        %v595 = vsub.f32 %v332, %v594
        %v596 = vand.u32 %v595, 4294901760
        %v597 = vsub.f32 %v595, %v596
        %v598 = vand.u32 %v597, 4294901760
        %599 = vmatpush1.msra.mxu0 %v598
        %600 = vmatprep.subr.mxu0 0.0
        %v601 = vand.u32 %v333, 4294901760
        %v602 = vsub.f32 %v333, %v601
        %v603 = vand.u32 %v602, 4294901760
        %v604 = vsub.f32 %v602, %v603
        %v605 = vand.u32 %v604, 4294901760
        %606 = vmatpush1.msra.mxu0 %v605
        %607 = vmatprep.subr.mxu0 0.0
        %v608 = vand.u32 %v334, 4294901760
        %v609 = vsub.f32 %v334, %v608
        %v610 = vand.u32 %v609, 4294901760
        %v611 = vsub.f32 %v609, %v610
        %v612 = vand.u32 %v611, 4294901760
        %613 = vmatpush1.msra.mxu0 %v612
        %614 = vmatprep.subr.mxu0 0.0
        %v615 = vand.u32 %v335, 4294901760
        %v616 = vsub.f32 %v335, %v615
        %v617 = vand.u32 %v616, 4294901760
        %v618 = vsub.f32 %v616, %v617
        %v619 = vand.u32 %v618, 4294901760
        %620 = vmatpush1.msra.mxu0 %v619
        %621 = vmatprep.subr.mxu0 0.0
        %v622 = vand.u32 %v336, 4294901760
        %v623 = vsub.f32 %v336, %v622
        %v624 = vand.u32 %v623, 4294901760
        %v625 = vsub.f32 %v623, %v624
        %v626 = vand.u32 %v625, 4294901760
        %627 = vmatpush1.msra.mxu0 %v626
        %628 = vmatprep.subr.mxu0 0.0
        %v629 = vand.u32 %v337, 4294901760
        %v630 = vsub.f32 %v337, %v629
        %v631 = vand.u32 %v630, 4294901760
        %v632 = vsub.f32 %v630, %v631
        %v633 = vand.u32 %v632, 4294901760
        %634 = vmatpush1.msra.mxu0 %v633
        %635 = vmatprep.subr.mxu0 0.0
        %v636 = vand.u32 %v338, 4294901760
        %v637 = vsub.f32 %v338, %v636
        %v638 = vand.u32 %v637, 4294901760
        %v639 = vsub.f32 %v637, %v638
        %v640 = vand.u32 %v639, 4294901760
        %641 = vmatpush1.msra.mxu0 %v640
        %642 = vmatprep.subr.mxu0 0.0
        %v643 = vand.u32 %v339, 4294901760
        %v644 = vsub.f32 %v339, %v643
        %v645 = vand.u32 %v644, 4294901760
        %v646 = vsub.f32 %v644, %v645
        %v647 = vand.u32 %v646, 4294901760
        %648 = vmatpush1.msra.mxu0 %v647
        %649 = vmatprep.subr.mxu0 0.0
        %v650 = vand.u32 %v340, 4294901760
        %v651 = vsub.f32 %v340, %v650
        %v652 = vand.u32 %v651, 4294901760
        %v653 = vsub.f32 %v651, %v652
        %v654 = vand.u32 %v653, 4294901760
        %655 = vmatpush1.msra.mxu0 %v654
        %656 = vmatprep.subr.mxu0 0.0
        %v657 = vand.u32 %v341, 4294901760
        %v658 = vsub.f32 %v341, %v657
        %v659 = vand.u32 %v658, 4294901760
        %v660 = vsub.f32 %v658, %v659
        %v661 = vand.u32 %v660, 4294901760
        %662 = vmatpush1.msra.mxu0 %v661
        %663 = vmatprep.subr.mxu0 0.0
        %v664 = vand.u32 %v342, 4294901760
        %v665 = vsub.f32 %v342, %v664
        %v666 = vand.u32 %v665, 4294901760
        %v667 = vsub.f32 %v665, %v666
        %v668 = vand.u32 %v667, 4294901760
        %669 = vmatpush1.msra.mxu0 %v668
        %670 = vmatprep.subr.mxu0 0.0
        %v671 = vand.u32 %v343, 4294901760
        %v672 = vsub.f32 %v343, %v671
        %v673 = vand.u32 %v672, 4294901760
        %v674 = vsub.f32 %v672, %v673
        %v675 = vand.u32 %v674, 4294901760
        %676 = vmatpush1.msra.mxu0 %v675
        %677 = vmatprep.subr.mxu0 0.0
        %v678 = vand.u32 %v344, 4294901760
        %v679 = vsub.f32 %v344, %v678
        %v680 = vand.u32 %v679, 4294901760
        %v681 = vsub.f32 %v679, %v680
        %v682 = vand.u32 %v681, 4294901760
        %683 = vmatpush1.msra.mxu0 %v682
        %684 = vmatprep.subr.mxu0 0.0
        %v685 = vand.u32 %v345, 4294901760
        %v686 = vsub.f32 %v345, %v685
        %v687 = vand.u32 %v686, 4294901760
        %v688 = vsub.f32 %v686, %v687
        %v689 = vand.u32 %v688, 4294901760
        %690 = vmatpush1.msra.mxu0 %v689
        %691 = vmatprep.subr.mxu0 0.0
        %v692 = vand.u32 %v346, 4294901760
        %v693 = vsub.f32 %v346, %v692
        %v694 = vand.u32 %v693, 4294901760
        %v695 = vsub.f32 %v693, %v694
        %v696 = vand.u32 %v695, 4294901760
        %697 = vmatpush1.msra.mxu0 %v696
        %v698 = vand.u32 %v312, 4294901760
        %699 = vmatprep.mubr.f32.mxu0 %v698
        %v700 = vand.u32 %v311, 4294901760
        %701 = vmatmul.mubr.f32.gmra.mrb[0].mxu0 %v700
        %v702 = vpop.f32.mrb[0].mxu0
        %v703 = vadd.f32 %v456, %v702
        %v704 = vpop.f32.mrb[0].mxu0
        %v705 = vand.u32 %v314, 4294901760
        %706 = vmatprep.mubr.f32.mxu0 %v705
        %v707 = vand.u32 %v313, 4294901760
        %708 = vmatmul.mubr.f32.gmra.mrb[0].mxu0 %v707
        %v709 = vpop.f32.mrb[0].mxu0
        %v710 = vadd.f32 %v471, %v709
        %v711 = vpop.f32.mrb[0].mxu0
        %712 = vdwg.mxu0
        %713 = vmatprep.subr.mxu0 0.0
        %v714 = vand.u32 %v315, 4294901760
        %v715 = vsub.f32 %v315, %v714
        %716 = vmatpush1.msra.mxu0 %v715
        %717 = vmatprep.subr.mxu0 0.0
        %v718 = vand.u32 %v316, 4294901760
        %v719 = vsub.f32 %v316, %v718
        %720 = vmatpush1.msra.mxu0 %v719
        %721 = vmatprep.subr.mxu0 0.0
        %v722 = vand.u32 %v317, 4294901760
        %v723 = vsub.f32 %v317, %v722
        %724 = vmatpush1.msra.mxu0 %v723
        %725 = vmatprep.subr.mxu0 0.0
        %v726 = vand.u32 %v318, 4294901760
        %v727 = vsub.f32 %v318, %v726
        %728 = vmatpush1.msra.mxu0 %v727
        %729 = vmatprep.subr.mxu0 0.0
        %v730 = vand.u32 %v319, 4294901760
        %v731 = vsub.f32 %v319, %v730
        %732 = vmatpush1.msra.mxu0 %v731
        %733 = vmatprep.subr.mxu0 0.0
        %v734 = vand.u32 %v320, 4294901760
        %v735 = vsub.f32 %v320, %v734
        %736 = vmatpush1.msra.mxu0 %v735
        %737 = vmatprep.subr.mxu0 0.0
        %v738 = vand.u32 %v321, 4294901760
        %v739 = vsub.f32 %v321, %v738
        %740 = vmatpush1.msra.mxu0 %v739
        %741 = vmatprep.subr.mxu0 0.0
        %v742 = vand.u32 %v322, 4294901760
        %v743 = vsub.f32 %v322, %v742
        %744 = vmatpush1.msra.mxu0 %v743
        %745 = vmatprep.subr.mxu0 0.0
        %v746 = vand.u32 %v323, 4294901760
        %v747 = vsub.f32 %v323, %v746
        %748 = vmatpush1.msra.mxu0 %v747
        %749 = vmatprep.subr.mxu0 0.0
        %v750 = vand.u32 %v324, 4294901760
        %v751 = vsub.f32 %v324, %v750
        %752 = vmatpush1.msra.mxu0 %v751
        %753 = vmatprep.subr.mxu0 0.0
        %v754 = vand.u32 %v325, 4294901760
        %v755 = vsub.f32 %v325, %v754
        %756 = vmatpush1.msra.mxu0 %v755
        %757 = vmatprep.subr.mxu0 0.0
        %v758 = vand.u32 %v326, 4294901760
        %v759 = vsub.f32 %v326, %v758
        %760 = vmatpush1.msra.mxu0 %v759
        %761 = vmatprep.subr.mxu0 0.0
        %v762 = vand.u32 %v327, 4294901760
        %v763 = vsub.f32 %v327, %v762
        %764 = vmatpush1.msra.mxu0 %v763
        %765 = vmatprep.subr.mxu0 0.0
        %v766 = vand.u32 %v328, 4294901760
        %v767 = vsub.f32 %v328, %v766
        %768 = vmatpush1.msra.mxu0 %v767
        %769 = vmatprep.subr.mxu0 0.0
        %v770 = vand.u32 %v329, 4294901760
        %v771 = vsub.f32 %v329, %v770
        %772 = vmatpush1.msra.mxu0 %v771
        %773 = vmatprep.subr.mxu0 0.0
        %v774 = vand.u32 %v330, 4294901760
        %v775 = vsub.f32 %v330, %v774
        %776 = vmatpush1.msra.mxu0 %v775
        %777 = vmatprep.subr.mxu0 0.0
        %v778 = vand.u32 %v331, 4294901760
        %v779 = vsub.f32 %v331, %v778
        %780 = vmatpush1.msra.mxu0 %v779
        %781 = vmatprep.subr.mxu0 0.0
        %v782 = vand.u32 %v332, 4294901760
        %v783 = vsub.f32 %v332, %v782
        %784 = vmatpush1.msra.mxu0 %v783
        %785 = vmatprep.subr.mxu0 0.0
        %v786 = vand.u32 %v333, 4294901760
        %v787 = vsub.f32 %v333, %v786
        %788 = vmatpush1.msra.mxu0 %v787
        %789 = vmatprep.subr.mxu0 0.0
        %v790 = vand.u32 %v334, 4294901760
        %v791 = vsub.f32 %v334, %v790
        %792 = vmatpush1.msra.mxu0 %v791
        %793 = vmatprep.subr.mxu0 0.0
        %v794 = vand.u32 %v335, 4294901760
        %v795 = vsub.f32 %v335, %v794
        %796 = vmatpush1.msra.mxu0 %v795
        %797 = vmatprep.subr.mxu0 0.0
        %v798 = vand.u32 %v336, 4294901760
        %v799 = vsub.f32 %v336, %v798
        %800 = vmatpush1.msra.mxu0 %v799
        %801 = vmatprep.subr.mxu0 0.0
        %v802 = vand.u32 %v337, 4294901760
        %v803 = vsub.f32 %v337, %v802
        %804 = vmatpush1.msra.mxu0 %v803
        %805 = vmatprep.subr.mxu0 0.0
        %v806 = vand.u32 %v338, 4294901760
        %v807 = vsub.f32 %v338, %v806
        %808 = vmatpush1.msra.mxu0 %v807
        %809 = vmatprep.subr.mxu0 0.0
        %v810 = vand.u32 %v339, 4294901760
        %v811 = vsub.f32 %v339, %v810
        %812 = vmatpush1.msra.mxu0 %v811
        %813 = vmatprep.subr.mxu0 0.0
        %v814 = vand.u32 %v340, 4294901760
        %v815 = vsub.f32 %v340, %v814
        %816 = vmatpush1.msra.mxu0 %v815
        %817 = vmatprep.subr.mxu0 0.0
        %v818 = vand.u32 %v341, 4294901760
        %v819 = vsub.f32 %v341, %v818
        %820 = vmatpush1.msra.mxu0 %v819
        %821 = vmatprep.subr.mxu0 0.0
        %v822 = vand.u32 %v342, 4294901760
        %v823 = vsub.f32 %v342, %v822
        %824 = vmatpush1.msra.mxu0 %v823
        %825 = vmatprep.subr.mxu0 0.0
        %v826 = vand.u32 %v343, 4294901760
        %v827 = vsub.f32 %v343, %v826
        %828 = vmatpush1.msra.mxu0 %v827
        %829 = vmatprep.subr.mxu0 0.0
        %v830 = vand.u32 %v344, 4294901760
        %v831 = vsub.f32 %v344, %v830
        %832 = vmatpush1.msra.mxu0 %v831
        %833 = vmatprep.subr.mxu0 0.0
        %v834 = vand.u32 %v345, 4294901760
        %v835 = vsub.f32 %v345, %v834
        %836 = vmatpush1.msra.mxu0 %v835
        %837 = vmatprep.subr.mxu0 0.0
        %v838 = vand.u32 %v346, 4294901760
        %v839 = vsub.f32 %v346, %v838
        %840 = vmatpush1.msra.mxu0 %v839
        %v841 = vand.u32 %v312, 4294901760
        %v842 = vsub.f32 %v312, %v841
        %843 = vmatprep.mubr.f32.mxu0 %v842
        %v844 = vand.u32 %v311, 4294901760
        %v845 = vsub.f32 %v311, %v844
        %846 = vmatmul.mubr.f32.gmra.mrb[0].mxu0 %v845
        %v847 = vpop.f32.mrb[0].mxu0
        %v848 = vadd.f32 %v703, %v847
        %v849 = vpop.f32.mrb[0].mxu0
        %v850 = vand.u32 %v314, 4294901760
        %v851 = vsub.f32 %v314, %v850
        %852 = vmatprep.mubr.f32.mxu0 %v851
        %v853 = vand.u32 %v313, 4294901760
        %v854 = vsub.f32 %v313, %v853
        %855 = vmatmul.mubr.f32.gmra.mrb[0].mxu0 %v854
        %v856 = vpop.f32.mrb[0].mxu0
        %v857 = vadd.f32 %v710, %v856
        %v858 = vpop.f32.mrb[0].mxu0
        %859 = vdwg.mxu0
        %860 = vmatprep.subr.mxu0 0.0
        %v861 = vand.u32 %v315, 4294901760
        %862 = vmatpush1.msra.mxu0 %v861
        %863 = vmatprep.subr.mxu0 0.0
        %v864 = vand.u32 %v316, 4294901760
        %865 = vmatpush1.msra.mxu0 %v864
        %866 = vmatprep.subr.mxu0 0.0
        %v867 = vand.u32 %v317, 4294901760
        %868 = vmatpush1.msra.mxu0 %v867
        %869 = vmatprep.subr.mxu0 0.0
        %v870 = vand.u32 %v318, 4294901760
        %871 = vmatpush1.msra.mxu0 %v870
        %872 = vmatprep.subr.mxu0 0.0
        %v873 = vand.u32 %v319, 4294901760
        %874 = vmatpush1.msra.mxu0 %v873
        %875 = vmatprep.subr.mxu0 0.0
        %v876 = vand.u32 %v320, 4294901760
        %877 = vmatpush1.msra.mxu0 %v876
        %878 = vmatprep.subr.mxu0 0.0
        %v879 = vand.u32 %v321, 4294901760
        %880 = vmatpush1.msra.mxu0 %v879
        %881 = vmatprep.subr.mxu0 0.0
        %v882 = vand.u32 %v322, 4294901760
        %883 = vmatpush1.msra.mxu0 %v882
        %884 = vmatprep.subr.mxu0 0.0
        %v885 = vand.u32 %v323, 4294901760
        %886 = vmatpush1.msra.mxu0 %v885
        %887 = vmatprep.subr.mxu0 0.0
        %v888 = vand.u32 %v324, 4294901760
        %889 = vmatpush1.msra.mxu0 %v888
        %890 = vmatprep.subr.mxu0 0.0
        %v891 = vand.u32 %v325, 4294901760
        %892 = vmatpush1.msra.mxu0 %v891
        %893 = vmatprep.subr.mxu0 0.0
        %v894 = vand.u32 %v326, 4294901760
        %895 = vmatpush1.msra.mxu0 %v894
        %896 = vmatprep.subr.mxu0 0.0
        %v897 = vand.u32 %v327, 4294901760
        %898 = vmatpush1.msra.mxu0 %v897
        %899 = vmatprep.subr.mxu0 0.0
        %v900 = vand.u32 %v328, 4294901760
        %901 = vmatpush1.msra.mxu0 %v900
        %902 = vmatprep.subr.mxu0 0.0
        %v903 = vand.u32 %v329, 4294901760
        %904 = vmatpush1.msra.mxu0 %v903
        %905 = vmatprep.subr.mxu0 0.0
        %v906 = vand.u32 %v330, 4294901760
        %907 = vmatpush1.msra.mxu0 %v906
        %908 = vmatprep.subr.mxu0 0.0
        %v909 = vand.u32 %v331, 4294901760
        %910 = vmatpush1.msra.mxu0 %v909
        %911 = vmatprep.subr.mxu0 0.0
        %v912 = vand.u32 %v332, 4294901760
        %913 = vmatpush1.msra.mxu0 %v912
        %914 = vmatprep.subr.mxu0 0.0
        %v915 = vand.u32 %v333, 4294901760
        %916 = vmatpush1.msra.mxu0 %v915
        %917 = vmatprep.subr.mxu0 0.0
        %v918 = vand.u32 %v334, 4294901760
        %919 = vmatpush1.msra.mxu0 %v918
        %920 = vmatprep.subr.mxu0 0.0
        %v921 = vand.u32 %v335, 4294901760
        %922 = vmatpush1.msra.mxu0 %v921
        %923 = vmatprep.subr.mxu0 0.0
        %v924 = vand.u32 %v336, 4294901760
        %925 = vmatpush1.msra.mxu0 %v924
        %926 = vmatprep.subr.mxu0 0.0
        %v927 = vand.u32 %v337, 4294901760
        %928 = vmatpush1.msra.mxu0 %v927
        %929 = vmatprep.subr.mxu0 0.0
        %v930 = vand.u32 %v338, 4294901760
        %931 = vmatpush1.msra.mxu0 %v930
        %932 = vmatprep.subr.mxu0 0.0
        %v933 = vand.u32 %v339, 4294901760
        %934 = vmatpush1.msra.mxu0 %v933
        %935 = vmatprep.subr.mxu0 0.0
        %v936 = vand.u32 %v340, 4294901760
        %937 = vmatpush1.msra.mxu0 %v936
        %938 = vmatprep.subr.mxu0 0.0
        %v939 = vand.u32 %v341, 4294901760
        %940 = vmatpush1.msra.mxu0 %v939
        %941 = vmatprep.subr.mxu0 0.0
        %v942 = vand.u32 %v342, 4294901760
        %943 = vmatpush1.msra.mxu0 %v942
        %944 = vmatprep.subr.mxu0 0.0
        %v945 = vand.u32 %v343, 4294901760
        %946 = vmatpush1.msra.mxu0 %v945
        %947 = vmatprep.subr.mxu0 0.0
        %v948 = vand.u32 %v344, 4294901760
        %949 = vmatpush1.msra.mxu0 %v948
        %950 = vmatprep.subr.mxu0 0.0
        %v951 = vand.u32 %v345, 4294901760
        %952 = vmatpush1.msra.mxu0 %v951
        %953 = vmatprep.subr.mxu0 0.0
        %v954 = vand.u32 %v346, 4294901760
        %955 = vmatpush1.msra.mxu0 %v954
        %v956 = vand.u32 %v312, 4294901760
        %v957 = vsub.f32 %v312, %v956
        %v958 = vand.u32 %v957, 4294901760
        %959 = vmatprep.mubr.f32.mxu0 %v958
        %v960 = vand.u32 %v311, 4294901760
        %v961 = vsub.f32 %v311, %v960
        %v962 = vand.u32 %v961, 4294901760
        %963 = vmatmul.mubr.f32.gmra.mrb[0].mxu0 %v962
        %v964 = vpop.f32.mrb[0].mxu0
        %v965 = vadd.f32 %v848, %v964
        %v966 = vpop.f32.mrb[0].mxu0
        %v967 = vand.u32 %v314, 4294901760
        %v968 = vsub.f32 %v314, %v967
        %v969 = vand.u32 %v968, 4294901760
        %970 = vmatprep.mubr.f32.mxu0 %v969
        %v971 = vand.u32 %v313, 4294901760
        %v972 = vsub.f32 %v313, %v971
        %v973 = vand.u32 %v972, 4294901760
        %974 = vmatmul.mubr.f32.gmra.mrb[0].mxu0 %v973
        %v975 = vpop.f32.mrb[0].mxu0
        %v976 = vadd.f32 %v857, %v975
        %v977 = vpop.f32.mrb[0].mxu0
        %978 = vdwg.mxu0
        %979 = vmatprep.subr.mxu0 0.0
        %v980 = vand.u32 %v315, 4294901760
        %v981 = vsub.f32 %v315, %v980
        %v982 = vand.u32 %v981, 4294901760
        %983 = vmatpush1.msra.mxu0 %v982
        %984 = vmatprep.subr.mxu0 0.0
        %v985 = vand.u32 %v316, 4294901760
        %v986 = vsub.f32 %v316, %v985
        %v987 = vand.u32 %v986, 4294901760
        %988 = vmatpush1.msra.mxu0 %v987
        %989 = vmatprep.subr.mxu0 0.0
        %v990 = vand.u32 %v317, 4294901760
        %v991 = vsub.f32 %v317, %v990
        %v992 = vand.u32 %v991, 4294901760
        %993 = vmatpush1.msra.mxu0 %v992
        %994 = vmatprep.subr.mxu0 0.0
        %v995 = vand.u32 %v318, 4294901760
        %v996 = vsub.f32 %v318, %v995
        %v997 = vand.u32 %v996, 4294901760
        %998 = vmatpush1.msra.mxu0 %v997
        %999 = vmatprep.subr.mxu0 0.0
        %v1000 = vand.u32 %v319, 4294901760
        %v1001 = vsub.f32 %v319, %v1000
        %v1002 = vand.u32 %v1001, 4294901760
        %1003 = vmatpush1.msra.mxu0 %v1002
        %1004 = vmatprep.subr.mxu0 0.0
        %v1005 = vand.u32 %v320, 4294901760
        %v1006 = vsub.f32 %v320, %v1005
        %v1007 = vand.u32 %v1006, 4294901760
        %1008 = vmatpush1.msra.mxu0 %v1007
        %1009 = vmatprep.subr.mxu0 0.0
        %v1010 = vand.u32 %v321, 4294901760
        %v1011 = vsub.f32 %v321, %v1010
        %v1012 = vand.u32 %v1011, 4294901760
        %1013 = vmatpush1.msra.mxu0 %v1012
        %1014 = vmatprep.subr.mxu0 0.0
        %v1015 = vand.u32 %v322, 4294901760
        %v1016 = vsub.f32 %v322, %v1015
        %v1017 = vand.u32 %v1016, 4294901760
        %1018 = vmatpush1.msra.mxu0 %v1017
        %1019 = vmatprep.subr.mxu0 0.0
        %v1020 = vand.u32 %v323, 4294901760
        %v1021 = vsub.f32 %v323, %v1020
        %v1022 = vand.u32 %v1021, 4294901760
        %1023 = vmatpush1.msra.mxu0 %v1022
        %1024 = vmatprep.subr.mxu0 0.0
        %v1025 = vand.u32 %v324, 4294901760
        %v1026 = vsub.f32 %v324, %v1025
        %v1027 = vand.u32 %v1026, 4294901760
        %1028 = vmatpush1.msra.mxu0 %v1027
        %1029 = vmatprep.subr.mxu0 0.0
        %v1030 = vand.u32 %v325, 4294901760
        %v1031 = vsub.f32 %v325, %v1030
        %v1032 = vand.u32 %v1031, 4294901760
        %1033 = vmatpush1.msra.mxu0 %v1032
        %1034 = vmatprep.subr.mxu0 0.0
        %v1035 = vand.u32 %v326, 4294901760
        %v1036 = vsub.f32 %v326, %v1035
        %v1037 = vand.u32 %v1036, 4294901760
        %1038 = vmatpush1.msra.mxu0 %v1037
        %1039 = vmatprep.subr.mxu0 0.0
        %v1040 = vand.u32 %v327, 4294901760
        %v1041 = vsub.f32 %v327, %v1040
        %v1042 = vand.u32 %v1041, 4294901760
        %1043 = vmatpush1.msra.mxu0 %v1042
        %1044 = vmatprep.subr.mxu0 0.0
        %v1045 = vand.u32 %v328, 4294901760
        %v1046 = vsub.f32 %v328, %v1045
        %v1047 = vand.u32 %v1046, 4294901760
        %1048 = vmatpush1.msra.mxu0 %v1047
        %1049 = vmatprep.subr.mxu0 0.0
        %v1050 = vand.u32 %v329, 4294901760
        %v1051 = vsub.f32 %v329, %v1050
        %v1052 = vand.u32 %v1051, 4294901760
        %1053 = vmatpush1.msra.mxu0 %v1052
        %1054 = vmatprep.subr.mxu0 0.0
        %v1055 = vand.u32 %v330, 4294901760
        %v1056 = vsub.f32 %v330, %v1055
        %v1057 = vand.u32 %v1056, 4294901760
        %1058 = vmatpush1.msra.mxu0 %v1057
        %1059 = vmatprep.subr.mxu0 0.0
        %v1060 = vand.u32 %v331, 4294901760
        %v1061 = vsub.f32 %v331, %v1060
        %v1062 = vand.u32 %v1061, 4294901760
        %1063 = vmatpush1.msra.mxu0 %v1062
        %1064 = vmatprep.subr.mxu0 0.0
        %v1065 = vand.u32 %v332, 4294901760
        %v1066 = vsub.f32 %v332, %v1065
        %v1067 = vand.u32 %v1066, 4294901760
        %1068 = vmatpush1.msra.mxu0 %v1067
        %1069 = vmatprep.subr.mxu0 0.0
        %v1070 = vand.u32 %v333, 4294901760
        %v1071 = vsub.f32 %v333, %v1070
        %v1072 = vand.u32 %v1071, 4294901760
        %1073 = vmatpush1.msra.mxu0 %v1072
        %1074 = vmatprep.subr.mxu0 0.0
        %v1075 = vand.u32 %v334, 4294901760
        %v1076 = vsub.f32 %v334, %v1075
        %v1077 = vand.u32 %v1076, 4294901760
        %1078 = vmatpush1.msra.mxu0 %v1077
        %1079 = vmatprep.subr.mxu0 0.0
        %v1080 = vand.u32 %v335, 4294901760
        %v1081 = vsub.f32 %v335, %v1080
        %v1082 = vand.u32 %v1081, 4294901760
        %1083 = vmatpush1.msra.mxu0 %v1082
        %1084 = vmatprep.subr.mxu0 0.0
        %v1085 = vand.u32 %v336, 4294901760
        %v1086 = vsub.f32 %v336, %v1085
        %v1087 = vand.u32 %v1086, 4294901760
        %1088 = vmatpush1.msra.mxu0 %v1087
        %1089 = vmatprep.subr.mxu0 0.0
        %v1090 = vand.u32 %v337, 4294901760
        %v1091 = vsub.f32 %v337, %v1090
        %v1092 = vand.u32 %v1091, 4294901760
        %1093 = vmatpush1.msra.mxu0 %v1092
        %1094 = vmatprep.subr.mxu0 0.0
        %v1095 = vand.u32 %v338, 4294901760
        %v1096 = vsub.f32 %v338, %v1095
        %v1097 = vand.u32 %v1096, 4294901760
        %1098 = vmatpush1.msra.mxu0 %v1097
        %1099 = vmatprep.subr.mxu0 0.0
        %v1100 = vand.u32 %v339, 4294901760
        %v1101 = vsub.f32 %v339, %v1100
        %v1102 = vand.u32 %v1101, 4294901760
        %1103 = vmatpush1.msra.mxu0 %v1102
        %1104 = vmatprep.subr.mxu0 0.0
        %v1105 = vand.u32 %v340, 4294901760
        %v1106 = vsub.f32 %v340, %v1105
        %v1107 = vand.u32 %v1106, 4294901760
        %1108 = vmatpush1.msra.mxu0 %v1107
        %1109 = vmatprep.subr.mxu0 0.0
        %v1110 = vand.u32 %v341, 4294901760
        %v1111 = vsub.f32 %v341, %v1110
        %v1112 = vand.u32 %v1111, 4294901760
        %1113 = vmatpush1.msra.mxu0 %v1112
        %1114 = vmatprep.subr.mxu0 0.0
        %v1115 = vand.u32 %v342, 4294901760
        %v1116 = vsub.f32 %v342, %v1115
        %v1117 = vand.u32 %v1116, 4294901760
        %1118 = vmatpush1.msra.mxu0 %v1117
        %1119 = vmatprep.subr.mxu0 0.0
        %v1120 = vand.u32 %v343, 4294901760
        %v1121 = vsub.f32 %v343, %v1120
        %v1122 = vand.u32 %v1121, 4294901760
        %1123 = vmatpush1.msra.mxu0 %v1122
        %1124 = vmatprep.subr.mxu0 0.0
        %v1125 = vand.u32 %v344, 4294901760
        %v1126 = vsub.f32 %v344, %v1125
        %v1127 = vand.u32 %v1126, 4294901760
        %1128 = vmatpush1.msra.mxu0 %v1127
        %1129 = vmatprep.subr.mxu0 0.0
        %v1130 = vand.u32 %v345, 4294901760
        %v1131 = vsub.f32 %v345, %v1130
        %v1132 = vand.u32 %v1131, 4294901760
        %1133 = vmatpush1.msra.mxu0 %v1132
        %1134 = vmatprep.subr.mxu0 0.0
        %v1135 = vand.u32 %v346, 4294901760
        %v1136 = vsub.f32 %v346, %v1135
        %v1137 = vand.u32 %v1136, 4294901760
        %1138 = vmatpush1.msra.mxu0 %v1137
        %v1139 = vand.u32 %v312, 4294901760
        %1140 = vmatprep.mubr.f32.mxu0 %v1139
        %v1141 = vand.u32 %v311, 4294901760
        %1142 = vmatmul.mubr.f32.gmra.mrb[0].mxu0 %v1141
        %v1143 = vpop.f32.mrb[0].mxu0
        %v1144 = vadd.f32 %v965, %v1143
        %v1145 = vpop.f32.mrb[0].mxu0
        %v1146 = vand.u32 %v314, 4294901760
        %1147 = vmatprep.mubr.f32.mxu0 %v1146
        %v1148 = vand.u32 %v313, 4294901760
        %1149 = vmatmul.mubr.f32.gmra.mrb[0].mxu0 %v1148
        %v1150 = vpop.f32.mrb[0].mxu0
        %v1151 = vadd.f32 %v976, %v1150
        %v1152 = vpop.f32.mrb[0].mxu0
        %1153 = vdwg.mxu0
        %1154 = vmatprep.subr.mxu0 0.0
        %v1155 = vand.u32 %v315, 4294901760
        %1156 = vmatpush1.msra.mxu0 %v1155
        %1157 = vmatprep.subr.mxu0 0.0
        %v1158 = vand.u32 %v316, 4294901760
        %1159 = vmatpush1.msra.mxu0 %v1158
        %1160 = vmatprep.subr.mxu0 0.0
        %v1161 = vand.u32 %v317, 4294901760
        %1162 = vmatpush1.msra.mxu0 %v1161
        %1163 = vmatprep.subr.mxu0 0.0
        %v1164 = vand.u32 %v318, 4294901760
        %1165 = vmatpush1.msra.mxu0 %v1164
        %1166 = vmatprep.subr.mxu0 0.0
        %v1167 = vand.u32 %v319, 4294901760
        %1168 = vmatpush1.msra.mxu0 %v1167
        %1169 = vmatprep.subr.mxu0 0.0
        %v1170 = vand.u32 %v320, 4294901760
        %1171 = vmatpush1.msra.mxu0 %v1170
        %1172 = vmatprep.subr.mxu0 0.0
        %v1173 = vand.u32 %v321, 4294901760
        %1174 = vmatpush1.msra.mxu0 %v1173
        %1175 = vmatprep.subr.mxu0 0.0
        %v1176 = vand.u32 %v322, 4294901760
        %1177 = vmatpush1.msra.mxu0 %v1176
        %1178 = vmatprep.subr.mxu0 0.0
        %v1179 = vand.u32 %v323, 4294901760
        %1180 = vmatpush1.msra.mxu0 %v1179
        %1181 = vmatprep.subr.mxu0 0.0
        %v1182 = vand.u32 %v324, 4294901760
        %1183 = vmatpush1.msra.mxu0 %v1182
        %1184 = vmatprep.subr.mxu0 0.0
        %v1185 = vand.u32 %v325, 4294901760
        %1186 = vmatpush1.msra.mxu0 %v1185
        %1187 = vmatprep.subr.mxu0 0.0
        %v1188 = vand.u32 %v326, 4294901760
        %1189 = vmatpush1.msra.mxu0 %v1188
        %1190 = vmatprep.subr.mxu0 0.0
        %v1191 = vand.u32 %v327, 4294901760
        %1192 = vmatpush1.msra.mxu0 %v1191
        %1193 = vmatprep.subr.mxu0 0.0
        %v1194 = vand.u32 %v328, 4294901760
        %1195 = vmatpush1.msra.mxu0 %v1194
        %1196 = vmatprep.subr.mxu0 0.0
        %v1197 = vand.u32 %v329, 4294901760
        %1198 = vmatpush1.msra.mxu0 %v1197
        %1199 = vmatprep.subr.mxu0 0.0
        %v1200 = vand.u32 %v330, 4294901760
        %1201 = vmatpush1.msra.mxu0 %v1200
        %1202 = vmatprep.subr.mxu0 0.0
        %v1203 = vand.u32 %v331, 4294901760
        %1204 = vmatpush1.msra.mxu0 %v1203
        %1205 = vmatprep.subr.mxu0 0.0
        %v1206 = vand.u32 %v332, 4294901760
        %1207 = vmatpush1.msra.mxu0 %v1206
        %1208 = vmatprep.subr.mxu0 0.0
        %v1209 = vand.u32 %v333, 4294901760
        %1210 = vmatpush1.msra.mxu0 %v1209
        %1211 = vmatprep.subr.mxu0 0.0
        %v1212 = vand.u32 %v334, 4294901760
        %1213 = vmatpush1.msra.mxu0 %v1212
        %1214 = vmatprep.subr.mxu0 0.0
        %v1215 = vand.u32 %v335, 4294901760
        %1216 = vmatpush1.msra.mxu0 %v1215
        %1217 = vmatprep.subr.mxu0 0.0
        %v1218 = vand.u32 %v336, 4294901760
        %1219 = vmatpush1.msra.mxu0 %v1218
        %1220 = vmatprep.subr.mxu0 0.0
        %v1221 = vand.u32 %v337, 4294901760
        %1222 = vmatpush1.msra.mxu0 %v1221
        %1223 = vmatprep.subr.mxu0 0.0
        %v1224 = vand.u32 %v338, 4294901760
        %1225 = vmatpush1.msra.mxu0 %v1224
        %1226 = vmatprep.subr.mxu0 0.0
        %v1227 = vand.u32 %v339, 4294901760
        %1228 = vmatpush1.msra.mxu0 %v1227
        %1229 = vmatprep.subr.mxu0 0.0
        %v1230 = vand.u32 %v340, 4294901760
        %1231 = vmatpush1.msra.mxu0 %v1230
        %1232 = vmatprep.subr.mxu0 0.0
        %v1233 = vand.u32 %v341, 4294901760
        %1234 = vmatpush1.msra.mxu0 %v1233
        %1235 = vmatprep.subr.mxu0 0.0
        %v1236 = vand.u32 %v342, 4294901760
        %1237 = vmatpush1.msra.mxu0 %v1236
        %1238 = vmatprep.subr.mxu0 0.0
        %v1239 = vand.u32 %v343, 4294901760
        %1240 = vmatpush1.msra.mxu0 %v1239
        %1241 = vmatprep.subr.mxu0 0.0
        %v1242 = vand.u32 %v344, 4294901760
        %1243 = vmatpush1.msra.mxu0 %v1242
        %1244 = vmatprep.subr.mxu0 0.0
        %v1245 = vand.u32 %v345, 4294901760
        %1246 = vmatpush1.msra.mxu0 %v1245
        %1247 = vmatprep.subr.mxu0 0.0
        %v1248 = vand.u32 %v346, 4294901760
        %1249 = vmatpush1.msra.mxu0 %v1248
        %v1250 = vand.u32 %v312, 4294901760
        %1251 = vmatprep.mubr.f32.mxu0 %v1250
        %v1252 = vand.u32 %v311, 4294901760
        %1253 = vmatmul.mubr.f32.gmra.mrb[0].mxu0 %v1252
        %v1254 = vpop.f32.mrb[0].mxu0
        %v1255 = vadd.f32 %v1144, %v1254
        %v1256 = vpop.f32.mrb[0].mxu0
        %v1257 = vand.u32 %v314, 4294901760
        %1258 = vmatprep.mubr.f32.mxu0 %v1257
        %v1259 = vand.u32 %v313, 4294901760
        %1260 = vmatmul.mubr.f32.gmra.mrb[0].mxu0 %v1259
        %v1261 = vpop.f32.mrb[0].mxu0
        %v1262 = vadd.f32 %v1151, %v1261
        %v1263 = vpop.f32.mrb[0].mxu0
        %1264 = vdwg.mxu0
        %v1265 = vmul.f32 %v1255, %v1255
        %v1266 = vmul.f32 %v1262, %v1262
        %vm1267 = vcmask 138368
        %v1268 = vsel %vm1267, %v1265, 0.0
        %v1269 = vrot.slane %v1268, 4
        %v1270 = vadd.f32 %v1268, %v1269
        %v1271 = vrot.slane %v1270, 2
        %v1272 = vadd.f32 %v1270, %v1271
        %v1273 = vrot.slane %v1272, 1
        %v1274 = vadd.f32 %v1272, %v1273
        %v1275 = vsel %vm1267, %v1266, 0.0
        %v1276 = vrot.slane %v1275, 4
        %v1277 = vadd.f32 %v1275, %v1276
        %v1278 = vrot.slane %v1277, 2
        %v1279 = vadd.f32 %v1277, %v1278
        %v1280 = vrot.slane %v1279, 1
        %v1281 = vadd.f32 %v1279, %v1280
        %v1282 = vrsqrt.pop %v1274
        %v1283 = vmul.f32 %v1274, %v1282
        %vm1284 = vcmp.eq.f32.partialorder %v1274, inf
        %v1285 = vsel %vm1284, %v1274, %v1283
        %vm1286 = vcmp.eq.f32.partialorder %v1274, 0.0
        %v1287 = vand.u32 %v1274, 2147483648
        %v1288 = vsel %vm1286, %v1287, %v1285
        %v1289 = vrsqrt.pop %v1281
        %v1290 = vmul.f32 %v1281, %v1289
        %vm1291 = vcmp.eq.f32.partialorder %v1281, inf
        %v1292 = vsel %vm1291, %v1281, %v1290
        %vm1293 = vcmp.eq.f32.partialorder %v1281, 0.0
        %v1294 = vand.u32 %v1281, 2147483648
        %v1295 = vsel %vm1293, %v1294, %v1292
        %v1296 = vadd.f32 %v1274, 1.0
        %v1297 = vadd.f32 %v1281, 1.0
        %v1298 = vrcp.pop %v1296
        %v1299 = vmul.f32 %v1288, %v1298
        %v1300 = vrcp.pop %v1297
        %v1301 = vmul.f32 %v1295, %v1300
        %1303 = vset.pattern.permute.xlu0 16
        %1304 = vperm.xlu0 %1303, %v1299
        %v1305 = vpop.permute.xlu0 %1304
        %1308 = vset.pattern.permute.xlu0 16
        %1309 = vperm.xlu0 %1308, %v1301
        %v1310 = vpop.permute.xlu0 %1309
        %v1312 = vmul.f32 %v1305, %v1255
        %v1313 = vmul.f32 %v1310, %v1262
        %vm1314 = vcmask 130048
        %1315 = vst.msk [vmem:[%s223] sm:$0xff] %vm1314, %v1312
        %1316 = vst.msk [vmem:[%s223 + $0x8] sm:$0xff] %vm1314, %v1313
        %s1317 = sand.u32 %s125, 1
        %s1318 = scalar_lea.sflag [#allocation3], %s1317
        %s1319 = sand.u32 %s125, 1
        %s1320 = smul.addr %s1319, 16
        %s1321 = scalar_lea.vmem [#allocation2], %s1320
        // Predicated region
        $region37: #{tpu_custom_call.1} parent=35 // pred_check
          %p1322 = pneg %p135
        $region38: #{tpu_custom_call.1} parent=35 // pred_check_branch
          %1324 = sbr.rel (%p1322) target = $region40
        $region39: #{tpu_custom_call.1} parent=35 // pred_region
          %s1325 = smul.u32 2, %s18
          %s1327 = ssub.s32 256, 256
          %1328 = vsyncadd %s1318, %s1327
          %s1329 = smul.addr %s1325, 128
          %s1330 = scalar_lea.hbm %s4, %s1329
          %s1331 = sshll.u32 %s1321, 4
          %s1332 = int_to_ptr.vmem [resolvable:$true] %s1331
          %1337 = dma.vmem_to_hbm [thread:$0]  %s1332, 256, %s1330, %s1318, 128, 128, 8
        $region40: #{tpu_custom_call.1} parent=35 // pred_fallthru
          _
      $region36: #{tpu_custom_call.1} parent=5 // pred_fallthru
        _
      %p1338 = scmp.le.s32.totalorder 2, %s13
      // Predicated region
      $region41: #{tpu_custom_call.1} parent=5 // pred_check
        %p1339 = pneg %p1338
      $region42: #{tpu_custom_call.1} parent=5 // pred_check_branch
        %1341 = sbr.rel (%p1339) target = $region44
      $region43: #{tpu_custom_call.1} parent=5 // pred_region
        %s1342 = ssub.s32 %s13, 2
        // Predicated region
        $region45: #{tpu_custom_call.1} parent=43 // pred_check
          %p1343 = pneg %p141
        $region46: #{tpu_custom_call.1} parent=43 // pred_check_branch
          %1345 = sbr.rel (%p1343) target = $region48
        $region47: #{tpu_custom_call.1} parent=43 // pred_region
          %s1346 = sand.u32 %s126, 1
          %s1347 = scalar_lea.sflag [#allocation3], %s1346
          %s1348 = sand.u32 %s126, 1
          %s1349 = smul.addr %s1348, 16
          %s1350 = scalar_lea.vmem [#allocation2], %s1349
          %1351 = dma.done %s1347, 256
        $region48: #{tpu_custom_call.1} parent=43 // pred_fallthru
          _
      $region44: #{tpu_custom_call.1} parent=5 // pred_fallthru
        _
    $region6: #{tpu_custom_call.1} parent=1 // loop_footer
      %s17 = sadd.s32 1, %s13
    $region7: #{tpu_custom_call.1} parent=1 // loop_footer_branch
      %12 = sbr.rel target = $region3
    $region8: #{tpu_custom_call.1} parent=1 // loop_exit
      _
    %1352 = vsyncpa [#allocation3], 1
    %s1353 = scalar_lea.sflag [#allocation3], 1
    %1354 = vsyncpa %s1353, 1

</llo_original>
